<compile_context>
chip_gen: v6e
topology: v6e:2x2x1
jax: 0.10.0
libtpu: 0.0.40
codegen_flags: <defaults>
</compile_context>

<pallas_src>
import functools

import jax
import jax.numpy as jnp
from jax.experimental import pallas as pl
from jax.experimental.pallas import tpu as pltpu


# Rough MXU-height worth of rows; below this the grid-less form is cheaper
# (no per-step pipeline overhead), above it a parallel grid feeds both v7x TCs.
_GRID_ROW_THRESHOLD = 256


def fuse_params(wg_t, bg, wt_t, bt, *, matmul_dtype=jnp.float32):
    """One-time parameter preparation (call at setup, NOT per forward).

    wg_t / wt_t: (D, D) weights in [in, out] layout (i.e. torch W.T).
    bg / bt:     (1, D) biases.
    Returns (w_fused (D, 2D) in `matmul_dtype`, b_fused (1, 2D) in f32).
    """
    w_fused = jnp.concatenate([wg_t, wt_t], axis=1).astype(matmul_dtype)
    b_fused = jnp.concatenate([bg, bt], axis=1).astype(jnp.float32)
    return w_fused, b_fused


def _gating_kernel_flat(x_ref, w_ref, b_ref, o_ref, *, size, B, D):
    # x_ref: (size*B, D)   all inputs stacked along M
    # w_ref: (D, 2D)       fused [Wg_t | Wt_t]   (f32 or bf16)
    # b_ref: (1, 2D)       fused [bg   | bt  ]   (f32)
    # o_ref: (B, size*D)   concat output slab
    x = x_ref[...].astype(w_ref.dtype)           # no-op when both f32
    y = jnp.dot(x, w_ref[...], preferred_element_type=jnp.float32)
    y = y + b_ref[...]                           # f32 elementwise from here on
    g = y[:, :D]                                 # lane-aligned static slices
    t = y[:, D:]
    out = (g * jax.nn.sigmoid(t)).astype(o_ref.dtype)   # (size*B, D)
    # Scatter row-blocks of `out` into lane-blocks of the concat output.
    # `size` is a small static constant -> unrolled; all slices are
    # (8,128)-aligned so these are plain unmasked stores.
    for i in range(size):
        o_ref[:, i * D:(i + 1) * D] = out[i * B:(i + 1) * B, :]


def _gating_kernel_grid(x_ref, w_ref, b_ref, o_ref, *, D):
    # One grid step per input i:
    #   x_ref: (1, B, D), w_ref: (D, 2D), b_ref: (1, 2D), o_ref: (B, D)
    x = x_ref[0].astype(w_ref.dtype)
    y = jnp.dot(x, w_ref[...], preferred_element_type=jnp.float32) + b_ref[...]
    o_ref[...] = (y[:, :D] * jax.nn.sigmoid(y[:, D:])).astype(o_ref.dtype)


@jax.jit
def highway_self_gating(inputs_stacked, w_fused, b_fused):
    """inputs_stacked: [size, B, D]; w_fused: [D, 2D]; b_fused: [1, 2D].
    Returns [B, size*D] (== torch.cat of the gated outputs, dim=-1)."""
    size, B, D = inputs_stacked.shape
    out_dtype = inputs_stacked.dtype
    min_rows = 8 if out_dtype == jnp.float32 else 16  # sublane packing
    assert D % 128 == 0, "d_model must be a multiple of 128 (lane-aligned)"
    assert B % min_rows == 0, "batch must be sublane-aligned for unmasked stores"
    out_shape = jax.ShapeDtypeStruct((B, size * D), out_dtype)

    if size * B >= _GRID_ROW_THRESHOLD:
        # Enough rows: 1-D parallel grid over `size` so both v7x TCs get work.
        return pl.pallas_call(
            functools.partial(_gating_kernel_grid, D=D),
            out_shape=out_shape,
            grid=(size,),
            in_specs=[
                pl.BlockSpec((1, B, D), lambda i: (i, 0, 0)),
                pl.BlockSpec((D, 2 * D), lambda i: (0, 0)),   # weight resident
                pl.BlockSpec((1, 2 * D), lambda i: (0, 0)),   # bias resident
            ],
            out_specs=pl.BlockSpec((B, D), lambda i: (0, i)),  # fused concat
            compiler_params=pltpu.CompilerParams(
                dimension_semantics=("parallel",)),
        )(inputs_stacked, w_fused, b_fused)

    # Tiny case: single grid-less invocation, whole operands resident in VMEM.
    x2d = inputs_stacked.reshape(size * B, D)    # free (row-major contiguous)
    return pl.pallas_call(
        functools.partial(_gating_kernel_flat, size=size, B=B, D=D),
        out_shape=out_shape,
        in_specs=[
            pl.BlockSpec(memory_space=pltpu.MemorySpace.VMEM),
            pl.BlockSpec(memory_space=pltpu.MemorySpace.VMEM),
            pl.BlockSpec(memory_space=pltpu.MemorySpace.VMEM),
        ],
        out_specs=pl.BlockSpec(memory_space=pltpu.MemorySpace.VMEM),
    )(x2d, w_fused, b_fused)


def _reference(inputs_stacked, wg_t, bg, wt_t, bt):
    outs = []
    for i in range(inputs_stacked.shape[0]):
        x = inputs_stacked[i]
        g = x @ wg_t + bg
        t = x @ wt_t + bt
        outs.append(g * jax.nn.sigmoid(t))
    return jnp.concatenate(outs, axis=-1)


if __name__ == "__main__":
    key = jax.random.PRNGKey(0)
    k_x, k_wg, k_bg, k_wt, k_bt, k_x2 = jax.random.split(key, 6)

    # ---- small config consistent with the module's forward (grid-less path) ----
    size, B, d_model = 3, 8, 128
    xs = jax.random.normal(k_x, (size, B, d_model), dtype=jnp.float32)

    # deterministic parameter init, PyTorch Linear convention W: [out, in]
    bound = 1.0 / jnp.sqrt(d_model)
    Wg = jax.random.uniform(k_wg, (d_model, d_model), jnp.float32, -bound, bound)
    bg = jax.random.uniform(k_bg, (1, d_model), jnp.float32, -bound, bound)
    Wt = jax.random.uniform(k_wt, (d_model, d_model), jnp.float32, -bound, bound)
    bt = jax.random.uniform(k_bt, (1, d_model), jnp.float32, -bound, bound)
    Wg_t, Wt_t = Wg.T, Wt.T     # kernel consumes [in, out] weights (x @ W^T == x @ W_t)

    # One-time parameter fusion (hoisted out of the per-call hot path).
    w_f32, b_f32 = fuse_params(Wg_t, bg, Wt_t, bt, matmul_dtype=jnp.float32)
    w_bf16, _ = fuse_params(Wg_t, bg, Wt_t, bt, matmul_dtype=jnp.bfloat16)

    ref = _reference(xs, Wg_t, bg, Wt_t, bt)

    # f32 matmul path (bit-for-bit-ish vs reference)
    out_f32 = jax.block_until_ready(highway_self_gating(xs, w_f32, b_f32))
    assert out_f32.shape == (B, size * d_model), out_f32.shape
    assert jnp.allclose(out_f32, ref, atol=1e-5, rtol=1e-5), float(
        jnp.max(jnp.abs(out_f32 - ref)))

    # bf16 matmul-operand path (f32 accumulate + f32 elementwise) — looser tol
    out_bf16 = jax.block_until_ready(highway_self_gating(xs, w_bf16, b_f32))
    assert jnp.allclose(out_bf16, ref, atol=3e-2, rtol=3e-2), float(
        jnp.max(jnp.abs(out_bf16 - ref)))

    # ---- larger config exercising the 1-D parallel grid path (v7x 2-TC) ----
    size2, B2 = 4, 64                            # size2*B2 = 256 rows -> grid path
    xs2 = jax.random.normal(k_x2, (size2, B2, d_model), dtype=jnp.float32)
    ref2 = _reference(xs2, Wg_t, bg, Wt_t, bt)
    out2 = jax.block_until_ready(highway_self_gating(xs2, w_f32, b_f32))
    assert out2.shape == (B2, size2 * d_model), out2.shape
    assert jnp.allclose(out2, ref2, atol=1e-5, rtol=1e-5), float(
        jnp.max(jnp.abs(out2 - ref2)))

    print("KERNEL_OK")
</pallas_src>

<mosaic_0001>
module attributes {stable_mosaic.version = 11 : i64} {
  func.func @_gating_kernel_flat(%arg0: memref<24x128xf32, #tpu.memory_space<vmem>>, %arg1: memref<128x256xf32, #tpu.memory_space<vmem>>, %arg2: memref<1x256xf32, #tpu.memory_space<vmem>>, %arg3: memref<8x384xf32, #tpu.memory_space<vmem>>) attributes {dimension_semantics = [], scalar_prefetch = 0 : i64, scratch_operands = 0 : i64, tpu.core_type = #tpu.core_type<tc>} {
    %c0 = arith.constant 0 : index
    %c0_0 = arith.constant 0 : index
    %0 = vector.load %arg0[%c0, %c0_0] : memref<24x128xf32, #tpu.memory_space<vmem>>, vector<24x128xf32>
    %c0_1 = arith.constant 0 : index
    %c0_2 = arith.constant 0 : index
    %1 = vector.load %arg1[%c0_1, %c0_2] : memref<128x256xf32, #tpu.memory_space<vmem>>, vector<128x256xf32>
    %cst = arith.constant dense<0.000000e+00> : vector<24x256xf32>
    %2 = tpu.matmul %0, %1, %cst {dimension_numbers = #tpu.dot_dimension_numbers<[1], [0], [0], [1], [0, 0, 1, 1], [], []>} : vector<24x128xf32>, vector<128x256xf32>, vector<24x256xf32> -> vector<24x256xf32>
    %c0_3 = arith.constant 0 : index
    %c0_4 = arith.constant 0 : index
    %3 = vector.load %arg2[%c0_3, %c0_4] : memref<1x256xf32, #tpu.memory_space<vmem>>, vector<1x256xf32>
    %4 = vector.broadcast %3 : vector<1x256xf32> to vector<24x256xf32>
    %5 = arith.addf %2, %4 : vector<24x256xf32>
    %6 = vector.extract_strided_slice %5 {offsets = [0, 0], sizes = [24, 128], strides = [1, 1]} : vector<24x256xf32> to vector<24x128xf32>
    %7 = vector.extract_strided_slice %5 {offsets = [0, 128], sizes = [24, 128], strides = [1, 1]} : vector<24x256xf32> to vector<24x128xf32>
    %8 = arith.negf %7 : vector<24x128xf32>
    %9 = math.exp %8 : vector<24x128xf32>
    %cst_5 = arith.constant 1.000000e+00 : f32
    %10 = vector.broadcast %cst_5 : f32 to vector<24x128xf32>
    %11 = arith.addf %10, %9 : vector<24x128xf32>
    %12 = arith.divf %10, %11 : vector<24x128xf32>
    %13 = arith.mulf %6, %12 : vector<24x128xf32>
    %14 = vector.extract_strided_slice %13 {offsets = [0, 0], sizes = [8, 128], strides = [1, 1]} : vector<24x128xf32> to vector<8x128xf32>
    %c0_6 = arith.constant 0 : index
    %c0_7 = arith.constant 0 : index
    %15 = vector.load %arg3[%c0_6, %c0_7] : memref<8x384xf32, #tpu.memory_space<vmem>>, vector<8x128xf32>
    tpu.vector_store %arg3[%c0_6, %c0_7], %14 {strides = array<i32>} : memref<8x384xf32, #tpu.memory_space<vmem>>, vector<8x128xf32>,
    %16 = vector.extract_strided_slice %13 {offsets = [8, 0], sizes = [8, 128], strides = [1, 1]} : vector<24x128xf32> to vector<8x128xf32>
    %c0_8 = arith.constant 0 : index
    %c128 = arith.constant 128 : index
    %17 = vector.load %arg3[%c0_8, %c128] : memref<8x384xf32, #tpu.memory_space<vmem>>, vector<8x128xf32>
    tpu.vector_store %arg3[%c0_8, %c128], %16 {strides = array<i32>} : memref<8x384xf32, #tpu.memory_space<vmem>>, vector<8x128xf32>,
    %18 = vector.extract_strided_slice %13 {offsets = [16, 0], sizes = [8, 128], strides = [1, 1]} : vector<24x128xf32> to vector<8x128xf32>
    %c0_9 = arith.constant 0 : index
    %c256 = arith.constant 256 : index
    %19 = vector.load %arg3[%c0_9, %c256] : memref<8x384xf32, #tpu.memory_space<vmem>>, vector<8x128xf32>
    tpu.vector_store %arg3[%c0_9, %c256], %18 {strides = array<i32>} : memref<8x384xf32, #tpu.memory_space<vmem>>, vector<8x128xf32>,
    return
  }
}

</mosaic_0001>

<llo_original>
// kernel: highway_self_gating.1
$region0: #{highway_self_gating.1}
  #allocation0 [shape = 'u32[]', space=smem, size = 0x4, offset = 0x4, fixed_abs, tag = 'smem constant byte address 0x4 - core index']
  #allocation1 [shape = 'u32[144,128]{1,0:T(1,128)}', space=vmem, size = 0x12000, scoped, tag = 'internal scratch']
  %s0 = inlined_call_operand.hbm [shape: f32[24,128], index: 0, kind: input, shape index: {}]
  %s1 = inlined_call_operand.hbm [shape: f32[128,256], index: 1, kind: input, shape index: {}]
  %s2 = inlined_call_operand.vmem [shape: f32[1,256], index: 2, kind: input, shape index: {}]
  %s3 = inlined_call_operand.hbm [shape: f32[8,384], index: 3, kind: output, shape index: {}]
  %s4 = sld [smem:[#allocation0]]
  $region30: #{highway_self_gating.1} parent=0
    _
  %s6 = ssub.s32 1, %s4
  %s7 = scalar_select 0, %s6, %s4
  $region1: #{highway_self_gating.1} parent=0
    #allocation2 [shape = 'u8[12288]{0}', space=vmem, size = 0x3000, scoped, tag = 'input window, operand 0, single buffered']
    #allocation3 [shape = 's32[1]{0}', space=sflag, size = 0x4, scoped, tag = 'scoped memory for highway_self_gating.1']
    #allocation4 [shape = 's32[1]{0}', space=sflag, size = 0x4, scoped, tag = 'scoped memory for highway_self_gating.1']
    #allocation5 [shape = 'u8[131072]{0}', space=vmem, size = 0x20000, scoped, tag = 'input window, operand 1, single buffered']
    #allocation6 [shape = 's32[1]{0}', space=sflag, size = 0x4, scoped, tag = 'scoped memory for highway_self_gating.1']
    #allocation7 [shape = 'u8[12288]{0}', space=vmem, size = 0x3000, scoped, tag = 'output window, operand 0, single buffered']
    %8 = vsyncpa [#allocation3], 0
    %9 = vsyncpa [#allocation6], 0
    %10 = vsyncpa [#allocation4], 0
    // Predicated region
    $region2: #{highway_self_gating.1} parent=1 // pred_check
      _
    $region3: #{highway_self_gating.1} parent=1 // pred_check_branch
      %12 = sbr.rel (0) target = $region5
    $region4: #{highway_self_gating.1} parent=1 // pred_region
      %s14 = ssub.s32 384, 384
      %15 = vsyncadd [#allocation3], %s14
      %s16 = sshll.u32 [#allocation2], 4
      %s17 = int_to_ptr.vmem [resolvable:$true] %s16
      %22 = dma.hbm_to_vmem [thread:$0]  %s0, 384, %s17, [#allocation3], 128, 128, 8
    $region5: #{highway_self_gating.1} parent=1 // pred_fallthru
      _
    // Predicated region
    $region6: #{highway_self_gating.1} parent=1 // pred_check
      _
    $region7: #{highway_self_gating.1} parent=1 // pred_check_branch
      %24 = sbr.rel (0) target = $region9
    $region8: #{highway_self_gating.1} parent=1 // pred_region
      %s26 = ssub.s32 4096, 4096
      %27 = vsyncadd [#allocation6], %s26
      %s28 = sshll.u32 [#allocation5], 4
      %s29 = int_to_ptr.vmem [resolvable:$true] %s28
      %34 = dma.hbm_to_vmem [thread:$0]  %s1, 4096, %s29, [#allocation6], 256, 256, 16
    $region9: #{highway_self_gating.1} parent=1 // pred_fallthru
      _
    // Predicated region
    $region10: #{highway_self_gating.1} parent=1 // pred_check
      _
    $region11: #{highway_self_gating.1} parent=1 // pred_check_branch
      %36 = sbr.rel (0) target = $region13
    $region12: #{highway_self_gating.1} parent=1 // pred_region
      _
    $region13: #{highway_self_gating.1} parent=1 // pred_fallthru
      _
    // Predicated region
    $region14: #{highway_self_gating.1} parent=1 // pred_check
      _
    $region15: #{highway_self_gating.1} parent=1 // pred_check_branch
      %38 = sbr.rel (0) target = $region17
    $region16: #{highway_self_gating.1} parent=1 // pred_region
      %39 = dma.done [#allocation3], 384
    $region17: #{highway_self_gating.1} parent=1 // pred_fallthru
      _
    // Predicated region
    $region18: #{highway_self_gating.1} parent=1 // pred_check
      _
    $region19: #{highway_self_gating.1} parent=1 // pred_check_branch
      %41 = sbr.rel (0) target = $region21
    $region20: #{highway_self_gating.1} parent=1 // pred_region
      %42 = dma.done [#allocation6], 4096
    $region21: #{highway_self_gating.1} parent=1 // pred_fallthru
      _
    %v43 = vld [vmem:[#allocation2] sm:$0xff]
    %v44 = vld [vmem:[#allocation2 + $0x8] sm:$0xff]
    %v45 = vld [vmem:[#allocation2 + $0x10] sm:$0xff]
    %v46 = vld [vmem:[#allocation5] sm:$0xff]
    %v47 = vld [vmem:[#allocation5 + $0x8] sm:$0xff]
    %v48 = vld [vmem:[#allocation5 + $0x10] sm:$0xff]
    %v49 = vld [vmem:[#allocation5 + $0x18] sm:$0xff]
    %v50 = vld [vmem:[#allocation5 + $0x20] sm:$0xff]
    %v51 = vld [vmem:[#allocation5 + $0x28] sm:$0xff]
    %v52 = vld [vmem:[#allocation5 + $0x30] sm:$0xff]
    %v53 = vld [vmem:[#allocation5 + $0x38] sm:$0xff]
    %v54 = vld [vmem:[#allocation5 + $0x40] sm:$0xff]
    %v55 = vld [vmem:[#allocation5 + $0x48] sm:$0xff]
    %v56 = vld [vmem:[#allocation5 + $0x50] sm:$0xff]
    %v57 = vld [vmem:[#allocation5 + $0x58] sm:$0xff]
    %v58 = vld [vmem:[#allocation5 + $0x60] sm:$0xff]
    %v59 = vld [vmem:[#allocation5 + $0x68] sm:$0xff]
    %v60 = vld [vmem:[#allocation5 + $0x70] sm:$0xff]
    %v61 = vld [vmem:[#allocation5 + $0x78] sm:$0xff]
    %v62 = vld [vmem:[#allocation5 + $0x80] sm:$0xff]
    %v63 = vld [vmem:[#allocation5 + $0x88] sm:$0xff]
    %v64 = vld [vmem:[#allocation5 + $0x90] sm:$0xff]
    %v65 = vld [vmem:[#allocation5 + $0x98] sm:$0xff]
    %v66 = vld [vmem:[#allocation5 + $0xa0] sm:$0xff]
    %v67 = vld [vmem:[#allocation5 + $0xa8] sm:$0xff]
    %v68 = vld [vmem:[#allocation5 + $0xb0] sm:$0xff]
    %v69 = vld [vmem:[#allocation5 + $0xb8] sm:$0xff]
    %v70 = vld [vmem:[#allocation5 + $0xc0] sm:$0xff]
    %v71 = vld [vmem:[#allocation5 + $0xc8] sm:$0xff]
    %v72 = vld [vmem:[#allocation5 + $0xd0] sm:$0xff]
    %v73 = vld [vmem:[#allocation5 + $0xd8] sm:$0xff]
    %v74 = vld [vmem:[#allocation5 + $0xe0] sm:$0xff]
    %v75 = vld [vmem:[#allocation5 + $0xe8] sm:$0xff]
    %v76 = vld [vmem:[#allocation5 + $0xf0] sm:$0xff]
    %v77 = vld [vmem:[#allocation5 + $0xf8] sm:$0xff]
    %v78 = vld [vmem:[%s2] sm:$0x3]
    %v80 = vlaneseq
    %v81 = vshrl.u32 %v80, 7
    %v82 = vsub.s32 0, %v81
    %v83 = vrot.slane %v78, %v82
    %v84 = vlaneseq
    %v85 = vshrl.u32 %v84, 7
    %v86 = vsub.s32 1, %v85
    %v87 = vrot.slane %v78, %v86
    %90 = vmatprep.subr.mxu0 %v77
    %91 = vmatpush1.msra.mxu0 %v76
    %92 = vmatprep.subr.mxu0 %v75
    %93 = vmatpush1.msra.mxu0 %v74
    %94 = vmatprep.subr.mxu0 %v73
    %95 = vmatpush1.msra.mxu0 %v72
    %96 = vmatprep.subr.mxu0 %v71
    %97 = vmatpush1.msra.mxu0 %v70
    %98 = vmatprep.subr.mxu0 %v69
    %99 = vmatpush1.msra.mxu0 %v68
    %100 = vmatprep.subr.mxu0 %v67
    %101 = vmatpush1.msra.mxu0 %v66
    %102 = vmatprep.subr.mxu0 %v65
    %103 = vmatpush1.msra.mxu0 %v64
    %104 = vmatprep.subr.mxu0 %v63
    %105 = vmatpush1.msra.mxu0 %v62
    %106 = vmatprep.subr.mxu0 %v61
    %107 = vmatpush1.msra.mxu0 %v60
    %108 = vmatprep.subr.mxu0 %v59
    %109 = vmatpush1.msra.mxu0 %v58
    %110 = vmatprep.subr.mxu0 %v57
    %111 = vmatpush1.msra.mxu0 %v56
    %112 = vmatprep.subr.mxu0 %v55
    %113 = vmatpush1.msra.mxu0 %v54
    %114 = vmatprep.subr.mxu0 %v53
    %115 = vmatpush1.msra.mxu0 %v52
    %116 = vmatprep.subr.mxu0 %v51
    %117 = vmatpush1.msra.mxu0 %v50
    %118 = vmatprep.subr.mxu0 %v49
    %119 = vmatpush1.msra.mxu0 %v48
    %120 = vmatprep.subr.mxu0 %v47
    %121 = vmatpush1.msra.mxu0 %v46
    %122 = vmatprep.subr.mxu0 0.0
    %123 = vmatpush2.msra.mxu0 0.0
    %124 = vmatprep.subr.mxu0 0.0
    %125 = vmatpush2.msra.mxu0 0.0
    %126 = vmatprep.subr.mxu0 0.0
    %127 = vmatpush2.msra.mxu0 0.0
    %128 = vmatprep.subr.mxu0 0.0
    %129 = vmatpush2.msra.mxu0 0.0
    %130 = vmatprep.subr.mxu0 0.0
    %131 = vmatpush2.msra.mxu0 0.0
    %132 = vmatprep.subr.mxu0 0.0
    %133 = vmatpush2.msra.mxu0 0.0
    %134 = vmatprep.subr.mxu0 0.0
    %135 = vmatpush2.msra.mxu0 0.0
    %136 = vmatprep.subr.mxu0 0.0
    %137 = vmatpush2.msra.mxu0 0.0
    %138 = vmatprep.subr.mxu0 0.0
    %139 = vmatpush2.msra.mxu0 0.0
    %140 = vmatprep.subr.mxu0 0.0
    %141 = vmatpush2.msra.mxu0 0.0
    %142 = vmatprep.subr.mxu0 0.0
    %143 = vmatpush2.msra.mxu0 0.0
    %144 = vmatprep.subr.mxu0 0.0
    %145 = vmatpush2.msra.mxu0 0.0
    %146 = vmatprep.subr.mxu0 0.0
    %147 = vmatpush2.msra.mxu0 0.0
    %148 = vmatprep.subr.mxu0 0.0
    %149 = vmatpush2.msra.mxu0 0.0
    %150 = vmatprep.subr.mxu0 0.0
    %151 = vmatpush2.msra.mxu0 0.0
    %152 = vmatprep.subr.mxu0 0.0
    %153 = vmatpush2.msra.mxu0 0.0
    %154 = vmatprep.mubr.f32.mxu0 0.0
    %155 = vmatmul.mubr.f32.gmra.mxu0 %v43
    %v156 = vpop.f32.mrf.mxu0
    %v157 = vadd.f32 %v83, %v156
    %v158 = vpop.f32.mrf.mxu0
    %v159 = vadd.f32 %v87, %v158
    %160 = vmatprep.mubr.f32.mxu0 0.0
    %161 = vmatmul.mubr.f32.gmra.mxu0 %v44
    %v162 = vpop.f32.mrf.mxu0
    %v163 = vadd.f32 %v83, %v162
    %v164 = vpop.f32.mrf.mxu0
    %v165 = vadd.f32 %v87, %v164
    %166 = vmatprep.mubr.f32.mxu0 0.0
    %167 = vmatmul.mubr.f32.gmra.mxu0 %v45
    %v168 = vpop.f32.mrf.mxu0
    %v169 = vadd.f32 %v83, %v168
    %v170 = vpop.f32.mrf.mxu0
    %v171 = vadd.f32 %v87, %v170
    %172 = vdwg.mxu0
    %v173 = vxor.u32 %v159, 2147483648
    %v174 = vxor.u32 %v165, 2147483648
    %v175 = vxor.u32 %v171, 2147483648
    %v176 = vmul.f32 %v173, 1.442695
    %v177 = vpow.pop %v176
    %v178 = vmul.f32 %v174, 1.442695
    %v179 = vpow.pop %v178
    %v180 = vmul.f32 %v175, 1.442695
    %v181 = vpow.pop %v180
    %v182 = vadd.f32 %v177, 1.0
    %v183 = vadd.f32 %v179, 1.0
    %v184 = vadd.f32 %v181, 1.0
    %v185 = vrcp.pop %v182
    %v186 = vmul.f32 1.0, %v185
    %v187 = vrcp.pop %v183
    %v188 = vmul.f32 1.0, %v187
    %v189 = vrcp.pop %v184
    %v190 = vmul.f32 1.0, %v189
    %v191 = vmul.f32 %v157, %v186
    %v192 = vmul.f32 %v163, %v188
    %v193 = vmul.f32 %v169, %v190
    %194 = vst [vmem:[#allocation7] sm:$0xff] %v191
    %195 = vst [vmem:[#allocation7 + $0x8] sm:$0xff] %v192
    %196 = vst [vmem:[#allocation7 + $0x10] sm:$0xff] %v193
    // Predicated region
    $region22: #{highway_self_gating.1} parent=1 // pred_check
      _
    $region23: #{highway_self_gating.1} parent=1 // pred_check_branch
      %198 = sbr.rel (0) target = $region25
    $region24: #{highway_self_gating.1} parent=1 // pred_region
      %s200 = ssub.s32 384, 384
      %201 = vsyncadd [#allocation4], %s200
      %s203 = sshll.u32 [#allocation7], 4
      %s204 = int_to_ptr.vmem [resolvable:$true] %s203
      %206 = dma.vmem_to_hbm [thread:$0]  %s204, 384, %s3, [#allocation4]
    $region25: #{highway_self_gating.1} parent=1 // pred_fallthru
      _
    // Predicated region
    $region26: #{highway_self_gating.1} parent=1 // pred_check
      _
    $region27: #{highway_self_gating.1} parent=1 // pred_check_branch
      %208 = sbr.rel (0) target = $region29
    $region28: #{highway_self_gating.1} parent=1 // pred_region
      %209 = dma.done [#allocation4], 384
    $region29: #{highway_self_gating.1} parent=1 // pred_fallthru
      _
    %210 = vsyncpa [#allocation3], 1
    %211 = vsyncpa [#allocation6], 1
    %212 = vsyncpa [#allocation4], 1

</llo_original>
